<compile_context>
chip_gen: v5e
topology: v5e:2x2
jax: 0.10.0
libtpu: 0.0.40
codegen_flags: <defaults>
</compile_context>

<pallas_src>
import functools
import math

import jax
import jax.numpy as jnp
from jax import lax
from jax.experimental import pallas as pl
from jax.experimental.pallas import tpu as pltpu


def _focal_dice_kernel(p_ref, t_ref, f_ref, num_ref, den_ref, *,
                       alpha, gamma, p_exp, cl, n_chunks, unroll):
    """Grid = (splits, row_blocks, d_tiles).
    Inputs:  (rb, td) logit / target tiles.
    Outputs: (rb, 128) lane-wide partial sums, resident across the d_tiles axis."""
    j = pl.program_id(2)
    rb = f_ref.shape[0]

    def lane_fold(v):
        # Pairwise tree fold of a (rb, cl) tile down to (rb, 128): pure VPU adds
        # of 128-aligned slices (log depth keeps the 4 VALU slots busy).
        parts = [v[:, b * 128:(b + 1) * 128] for b in range(cl // 128)]
        while len(parts) > 1:
            nxt = [parts[i] + parts[i + 1] for i in range(0, len(parts) - 1, 2)]
            if len(parts) % 2:
                nxt.append(parts[-1])
            parts = nxt
        return parts[0]

    def chunk(c, carry):
        f_acc, n_acc, d_acc = carry
        if isinstance(c, int):
            off = c * cl
        else:
            off = pl.multiple_of(c * cl, 128)
        x = p_ref[:, pl.ds(off, cl)].astype(jnp.float32)   # logits
        t = t_ref[:, pl.ds(off, cl)].astype(jnp.float32)   # targets

        # One shared EUP exp feeds both sigmoid and the stable BCE-with-logits.
        e = jnp.exp(-jnp.abs(x))
        one_plus_e = 1.0 + e
        # sigmoid via EUP approx reciprocal + one Newton step (~1e-7 rel error);
        # avoids the full-precision VALU divide.
        inv = pl.reciprocal(one_plus_e, approx=True)
        inv = inv * (2.0 - one_plus_e * inv)
        p_sig = jnp.where(x >= 0.0, 1.0, e) * inv
        ce = jnp.maximum(x, 0.0) - x * t + jnp.log1p(e)

        st = p_sig * t                          # shared by focal p_t and dice num
        q = p_sig + t - 2.0 * st                # == 1 - p_t (algebraic fold)
        if gamma == 2.0:                        # default: 1 multiply, no pow
            modul = q * q
        elif gamma == 1.0:
            modul = q
        else:
            modul = q ** gamma
        focal = ce * modul
        if alpha >= 0.0:                        # folded alpha*t + (1-alpha)*(1-t)
            focal = ((1.0 - alpha) + (2.0 * alpha - 1.0) * t) * focal

        if p_exp == 2.0:                        # default: multiplies, no pow
            den_e = p_sig * p_sig + t * t
        elif p_exp == 1.0:
            den_e = p_sig + t
        else:
            den_e = p_sig ** p_exp + t ** p_exp

        return (f_acc + lane_fold(focal),
                n_acc + lane_fold(st),
                d_acc + lane_fold(den_e))

    zero = jnp.zeros((rb, 128), jnp.float32)
    if n_chunks == 1:
        f_p, n_p, d_p = chunk(0, (zero, zero, zero))
    else:
        f_p, n_p, d_p = lax.fori_loop(0, n_chunks, chunk, (zero, zero, zero),
                                      unroll=unroll)

    # Single touch of the output refs per grid step (accumulate across the
    # "arbitrary" D axis; first step writes directly, no zero-init RMW).
    @pl.when(j == 0)
    def _first():
        f_ref[...] = f_p
        num_ref[...] = n_p
        den_ref[...] = d_p

    @pl.when(j > 0)
    def _accum():
        f_ref[...] += f_p
        num_ref[...] += n_p
        den_ref[...] += d_p


def focal_dice_loss(predict, target, *, lmbda=0.8, alpha=0.25, gamma=2.0,
                    smooth=1.0, p=2.0, max_block_bytes=None):
    """predict/target: [N, *] arrays (e.g. NCHW logits / binary masks).
    Returns the scalar FocalDiceLoss with reduction='mean'."""
    assert predict.shape == target.shape, "predict & target shapes must match"
    n = predict.shape[0]
    d = 1
    for s in predict.shape[1:]:
        d *= s

    # Keep native dtype (no wrapper up-cast: HBM traffic stays at input width).
    x = predict.reshape(n, d)
    t = target.reshape(n, d)

    # Sublane packing: fold features into sublanes so rows is always a multiple
    # of 8 (g = 8/gcd(N,8)), then pad D up to a multiple of g*128.
    g = 8 // math.gcd(n, 8)
    lane_quantum = g * 128
    d_pad = ((d + lane_quantum - 1) // lane_quantum) * lane_quantum
    if d_pad != d:
        # Padding values contribute exactly zero to focal, num and den
        # (x=-1e9 -> sigmoid=0, ce=0; t=0).
        # TODO(synk): mask the ragged tail in-kernel (iota + where) to avoid this
        # extra HBM pass on mem-bound v5e when D is large and ragged.
        pad = d_pad - d
        x = jnp.pad(x, ((0, 0), (0, pad)), constant_values=-1e9)
        t = jnp.pad(t, ((0, 0), (0, pad)), constant_values=0)
    rows = n * g
    d2 = d_pad // g
    x = x.reshape(rows, d2)
    t = t.reshape(rows, d2)

    # Row blocking (bounds vreg pressure for large batches).
    if rows <= 32:
        rb = rows
    else:
        rb = 8
        for cand in (32, 24, 16, 8):
            if rows % cand == 0:
                rb = cand
                break
    n_row_blocks = rows // rb

    # Generation-aware block / VMEM budgets (v7x: 64 MiB VMEM; v5e/v6e: 128 MiB).
    try:
        vmem_cap = getattr(pltpu.get_tpu_info(), "vmem_capacity_bytes", None)
    except Exception:
        vmem_cap = None
    small_vmem = None if vmem_cap is None else (vmem_cap <= 80 * 1024 * 1024)
    if max_block_bytes is None:
        max_block_bytes = (8 if small_vmem is False else 4) * 1024 * 1024
    soft_cap = (64 if small_vmem is False else 28) * 1024 * 1024

    # Largest lane-dense D tile that divides d2 and fits the per-block budget.
    itemsize = max(jnp.dtype(x.dtype).itemsize, jnp.dtype(t.dtype).itemsize)
    k_total = d2 // 128
    max_k = max(1, min(k_total, max_block_bytes // (rb * itemsize * 128)))
    best_k = 1
    for k in range(max_k, 0, -1):
        if k_total % k == 0:
            best_k = k
            break
    td = best_k * 128
    n_tiles = d2 // td

    # Guarantee >=2 independent "parallel" grid slices whenever possible so both
    # v7x TensorCores get work (near-zero cost on single-TC v5e/v6e).
    n_splits = 1
    if n_tiles >= 2 and n_tiles % 2 == 0:
        n_splits = 2
    elif n_row_blocks == 1 and rows >= 16:
        rb = rows // 2 if (rows // 2) % 8 == 0 else 8
        n_row_blocks = rows // rb
    tiles_per_split = n_tiles // n_splits

    # In-kernel lane-chunk size: ~8K f32 elements live per intermediate (the
    # partial accumulators are carried in vregs, so this stays well under 64 vregs).
    k_td = td // 128
    target_k = max(1, 8192 // max(rb, 1) // 128)
    g_cl = 1
    for cand in range(min(target_k, k_td), 0, -1):
        if k_td % cand == 0:
            g_cl = cand
            break
    cl = g_cl * 128
    n_chunks = td // cl
    unroll = True if n_chunks <= 8 else 4      # full unroll when short, else 4x

    need = 2 * 2 * rb * td * itemsize + 3 * 2 * rb * 128 * 4 + (2 << 20)
    vmem_limit = int(min(soft_cap, max(16 << 20, need)))

    kernel = functools.partial(
        _focal_dice_kernel,
        alpha=float(alpha), gamma=float(gamma), p_exp=float(p),
        cl=cl, n_chunks=n_chunks, unroll=unroll)

    in_map = lambda s, r, j: (r, s * tiles_per_split + j)
    out_map = lambda s, r, j: (s, r, 0)
    part_shape = jax.ShapeDtypeStruct((n_splits, rows, 128), jnp.float32)

    f_part, num_part, den_part = pl.pallas_call(
        kernel,
        out_shape=(part_shape, part_shape, part_shape),
        grid_spec=pltpu.PrefetchScalarGridSpec(
            num_scalar_prefetch=0,
            grid=(n_splits, n_row_blocks, tiles_per_split),
            in_specs=[
                pl.BlockSpec((rb, td), in_map),
                pl.BlockSpec((rb, td), in_map),
            ],
            out_specs=(
                pl.BlockSpec((None, rb, 128), out_map),
                pl.BlockSpec((None, rb, 128), out_map),
                pl.BlockSpec((None, rb, 128), out_map),
            ),
        ),
        compiler_params=pltpu.CompilerParams(
            dimension_semantics=("parallel", "parallel", "arbitrary"),
            vmem_limit_bytes=vmem_limit),
    )(x, t)

    # Tiny final combine (O(rows*128) elements) outside the kernel.
    inv_count = 1.0 / float(n * d)                     # exact in f64, baked in
    focal_mean = jnp.sum(f_part, dtype=jnp.float32) * jnp.float32(inv_count)

    num_n = jnp.sum(num_part, axis=(0, 2)).reshape(n, g).sum(axis=1)
    den_n = jnp.sum(den_part, axis=(0, 2)).reshape(n, g).sum(axis=1)
    dice = 1.0 - (num_n + smooth) / (den_n + smooth)
    dice_mean = jnp.mean(dice)                         # reduction='mean'
    # TODO(synk): reduction='sum' / 'none' module variants are not exposed here.

    return lmbda * focal_mean + (1.0 - lmbda) * dice_mean


def _reference(predict, target, *, lmbda=0.8, alpha=0.25, gamma=2.0,
               smooth=1.0, p=2.0):
    n = predict.shape[0]
    x = predict.reshape(n, -1).astype(jnp.float32)
    t = target.reshape(n, -1).astype(jnp.float32)
    ps = jax.nn.sigmoid(x)
    ce = jnp.maximum(x, 0.0) - x * t + jnp.log1p(jnp.exp(-jnp.abs(x)))
    p_t = ps * t + (1 - ps) * (1 - t)
    focal = (alpha * t + (1 - alpha) * (1 - t)) * ce * (1 - p_t) ** gamma
    focal_mean = jnp.mean(focal)
    num = jnp.sum(ps * t, axis=1) + smooth
    den = jnp.sum(ps ** p + t ** p, axis=1) + smooth
    dice_mean = jnp.mean(1 - num / den)
    return lmbda * focal_mean + (1 - lmbda) * dice_mean


def _check(shape, key, **kw):
    k1, k2 = jax.random.split(key)
    predict = jax.random.normal(k1, shape, dtype=jnp.float32)
    target = (jax.random.uniform(k2, shape) > 0.5).astype(jnp.float32)
    loss = jax.block_until_ready(focal_dice_loss(predict, target, **kw))
    ref = _reference(predict, target)
    assert jnp.allclose(loss, ref, rtol=2e-5, atol=2e-5), (shape, kw, loss, ref)
    return loss


if __name__ == "__main__":
    key = jax.random.PRNGKey(0)
    # Primary shape implied by the module's forward: NCHW logits + binary mask.
    _check((2, 4, 16, 16), key)
    # Fully-unrolled in-kernel chunk loop (n_chunks > 1, unroll=True).
    _check((8, 4, 32, 32), key)
    # Multi-tile accumulation across the "arbitrary" D axis + 2-way D split.
    _check((8, 4, 32, 32), key, max_block_bytes=8192)
    # 2-way parallel split with single-chunk tiles.
    _check((2, 4, 16, 16), key, max_block_bytes=4096)
    # Ragged D + sublane-packing fix (n=2 -> g=4, rows=8).
    _check((2, 3, 16, 16), key, max_block_bytes=1024)
    # Row-split fallback that keeps a second parallel slice when n_tiles == 1.
    _check((16, 4, 32, 32), key)
    # Long chunk loop -> partially-unrolled (unroll=4) fori_loop path.
    _check((4, 8, 64, 64), key)
    print("KERNEL_OK")
</pallas_src>

<mosaic_0001>
module attributes {stable_mosaic.version = 11 : i64} {
  func.func @_focal_dice_kernel(%arg0: i32, %arg1: i32, %arg2: i32, %arg3: memref<8x256xf32, #tpu.memory_space<vmem>>, %arg4: memref<8x256xf32, #tpu.memory_space<vmem>>, %arg5: memref<1x8x128xf32, #tpu.memory_space<vmem>>, %arg6: memref<1x8x128xf32, #tpu.memory_space<vmem>>, %arg7: memref<1x8x128xf32, #tpu.memory_space<vmem>>) attributes {dimension_semantics = [#tpu.dimension_semantics<parallel>, #tpu.dimension_semantics<parallel>, #tpu.dimension_semantics<arbitrary>], iteration_bounds = array<i64: 1, 1, 1>, scalar_prefetch = 0 : i64, scratch_operands = 0 : i64, tpu.core_type = #tpu.core_type<tc>, window_params = [{transform_indices = @transform_0, window_bounds = array<i64: 8, 256>}, {transform_indices = @transform_1, window_bounds = array<i64: 8, 256>}, {transform_indices = @transform_2, window_bounds = array<i64: 1, 8, 128>}, {transform_indices = @transform_3, window_bounds = array<i64: 1, 8, 128>}, {transform_indices = @transform_4, window_bounds = array<i64: 1, 8, 128>}]} {
    %cst = arith.constant 0.000000e+00 : f32
    %0 = vector.broadcast %cst : f32 to vector<8x128xf32>
    %c0 = arith.constant 0 : index
    %c0_0 = arith.constant 0 : index
    %1 = vector.load %arg3[%c0, %c0_0] : memref<8x256xf32, #tpu.memory_space<vmem>>, vector<8x256xf32>
    %c0_1 = arith.constant 0 : index
    %c0_2 = arith.constant 0 : index
    %2 = vector.load %arg4[%c0_1, %c0_2] : memref<8x256xf32, #tpu.memory_space<vmem>>, vector<8x256xf32>
    %3 = math.absf %1 : vector<8x256xf32>
    %cst_3 = arith.constant 0.000000e+00 : f32
    %4 = vector.broadcast %cst_3 : f32 to vector<8x256xf32>
    %5 = arith.subf %4, %3 : vector<8x256xf32>
    %6 = math.exp %5 : vector<8x256xf32>
    %cst_4 = arith.constant 1.000000e+00 : f32
    %7 = vector.broadcast %cst_4 : f32 to vector<8x256xf32>
    %8 = arith.addf %7, %6 : vector<8x256xf32>
    %9 = tpu.reciprocal %8 {approx = true} : vector<8x256xf32> -> vector<8x256xf32>
    %10 = arith.mulf %8, %9 : vector<8x256xf32>
    %cst_5 = arith.constant 2.000000e+00 : f32
    %11 = vector.broadcast %cst_5 : f32 to vector<8x256xf32>
    %12 = arith.subf %11, %10 : vector<8x256xf32>
    %13 = arith.mulf %9, %12 : vector<8x256xf32>
    %cst_6 = arith.constant 0.000000e+00 : f32
    %14 = vector.broadcast %cst_6 : f32 to vector<8x256xf32>
    %15 = arith.cmpf oge, %1, %14 : vector<8x256xf32>
    %cst_7 = arith.constant 1.000000e+00 : f32
    %16 = vector.broadcast %cst_7 : f32 to vector<8x256xf32>
    %17 = arith.select %15, %16, %6 : vector<8x256xi1>, vector<8x256xf32>
    %18 = arith.mulf %17, %13 : vector<8x256xf32>
    %cst_8 = arith.constant 0.000000e+00 : f32
    %19 = vector.broadcast %cst_8 : f32 to vector<8x256xf32>
    %20 = arith.maximumf %1, %19 : vector<8x256xf32>
    %21 = arith.mulf %1, %2 : vector<8x256xf32>
    %22 = arith.subf %20, %21 : vector<8x256xf32>
    %23 = math.log1p %6 : vector<8x256xf32>
    %24 = arith.addf %22, %23 : vector<8x256xf32>
    %25 = arith.mulf %18, %2 : vector<8x256xf32>
    %26 = arith.addf %18, %2 : vector<8x256xf32>
    %cst_9 = arith.constant 2.000000e+00 : f32
    %27 = vector.broadcast %cst_9 : f32 to vector<8x256xf32>
    %28 = arith.mulf %27, %25 : vector<8x256xf32>
    %29 = arith.subf %26, %28 : vector<8x256xf32>
    %30 = arith.mulf %29, %29 : vector<8x256xf32>
    %31 = arith.mulf %24, %30 : vector<8x256xf32>
    %cst_10 = arith.constant -5.000000e-01 : f32
    %32 = vector.broadcast %cst_10 : f32 to vector<8x256xf32>
    %33 = arith.mulf %32, %2 : vector<8x256xf32>
    %cst_11 = arith.constant 7.500000e-01 : f32
    %34 = vector.broadcast %cst_11 : f32 to vector<8x256xf32>
    %35 = arith.addf %34, %33 : vector<8x256xf32>
    %36 = arith.mulf %35, %31 : vector<8x256xf32>
    %37 = arith.mulf %18, %18 : vector<8x256xf32>
    %38 = arith.mulf %2, %2 : vector<8x256xf32>
    %39 = arith.addf %37, %38 : vector<8x256xf32>
    %40 = vector.extract_strided_slice %36 {offsets = [0, 0], sizes = [8, 128], strides = [1, 1]} : vector<8x256xf32> to vector<8x128xf32>
    %41 = vector.extract_strided_slice %36 {offsets = [0, 128], sizes = [8, 128], strides = [1, 1]} : vector<8x256xf32> to vector<8x128xf32>
    %42 = arith.addf %40, %41 : vector<8x128xf32>
    %43 = arith.addf %0, %42 : vector<8x128xf32>
    %44 = vector.extract_strided_slice %25 {offsets = [0, 0], sizes = [8, 128], strides = [1, 1]} : vector<8x256xf32> to vector<8x128xf32>
    %45 = vector.extract_strided_slice %25 {offsets = [0, 128], sizes = [8, 128], strides = [1, 1]} : vector<8x256xf32> to vector<8x128xf32>
    %46 = arith.addf %44, %45 : vector<8x128xf32>
    %47 = arith.addf %0, %46 : vector<8x128xf32>
    %48 = vector.extract_strided_slice %39 {offsets = [0, 0], sizes = [8, 128], strides = [1, 1]} : vector<8x256xf32> to vector<8x128xf32>
    %49 = vector.extract_strided_slice %39 {offsets = [0, 128], sizes = [8, 128], strides = [1, 1]} : vector<8x256xf32> to vector<8x128xf32>
    %50 = arith.addf %48, %49 : vector<8x128xf32>
    %51 = arith.addf %0, %50 : vector<8x128xf32>
    %c0_i32 = arith.constant 0 : i32
    %52 = arith.cmpi eq, %arg2, %c0_i32 : i32
    %53 = arith.extui %52 : i1 to i32
    %c0_i32_12 = arith.constant 0 : i32
    %54 = arith.cmpi ne, %53, %c0_i32_12 : i32
    scf.if %54 {
      %c0_15 = arith.constant 0 : index
      %c0_16 = arith.constant 0 : index
      %c0_17 = arith.constant 0 : index
      %58 = vector.load %arg5[%c0_15, %c0_16, %c0_17] : memref<1x8x128xf32, #tpu.memory_space<vmem>>, vector<1x8x128xf32>
      %59 = vector.shape_cast %58 : vector<1x8x128xf32> to vector<8x128xf32>
      %60 = vector.shape_cast %43 : vector<8x128xf32> to vector<1x8x128xf32>
      tpu.vector_store %arg5[%c0_15, %c0_16, %c0_17], %60 {strides = array<i32>} : memref<1x8x128xf32, #tpu.memory_space<vmem>>, vector<1x8x128xf32>,
      %c0_18 = arith.constant 0 : index
      %c0_19 = arith.constant 0 : index
      %c0_20 = arith.constant 0 : index
      %61 = vector.load %arg6[%c0_18, %c0_19, %c0_20] : memref<1x8x128xf32, #tpu.memory_space<vmem>>, vector<1x8x128xf32>
      %62 = vector.shape_cast %61 : vector<1x8x128xf32> to vector<8x128xf32>
      %63 = vector.shape_cast %47 : vector<8x128xf32> to vector<1x8x128xf32>
      tpu.vector_store %arg6[%c0_18, %c0_19, %c0_20], %63 {strides = array<i32>} : memref<1x8x128xf32, #tpu.memory_space<vmem>>, vector<1x8x128xf32>,
      %c0_21 = arith.constant 0 : index
      %c0_22 = arith.constant 0 : index
      %c0_23 = arith.constant 0 : index
      %64 = vector.load %arg7[%c0_21, %c0_22, %c0_23] : memref<1x8x128xf32, #tpu.memory_space<vmem>>, vector<1x8x128xf32>
      %65 = vector.shape_cast %64 : vector<1x8x128xf32> to vector<8x128xf32>
      %66 = vector.shape_cast %51 : vector<8x128xf32> to vector<1x8x128xf32>
      tpu.vector_store %arg7[%c0_21, %c0_22, %c0_23], %66 {strides = array<i32>} : memref<1x8x128xf32, #tpu.memory_space<vmem>>, vector<1x8x128xf32>,
    } else {
    }
    %c0_i32_13 = arith.constant 0 : i32
    %55 = arith.cmpi sgt, %arg2, %c0_i32_13 : i32
    %56 = arith.extui %55 : i1 to i32
    %c0_i32_14 = arith.constant 0 : i32
    %57 = arith.cmpi ne, %56, %c0_i32_14 : i32
    scf.if %57 {
      %c0_15 = arith.constant 0 : index
      %c0_16 = arith.constant 0 : index
      %c0_17 = arith.constant 0 : index
      %58 = vector.load %arg5[%c0_15, %c0_16, %c0_17] : memref<1x8x128xf32, #tpu.memory_space<vmem>>, vector<1x8x128xf32>
      %59 = vector.shape_cast %58 : vector<1x8x128xf32> to vector<8x128xf32>
      %60 = arith.addf %59, %43 : vector<8x128xf32>
      %c0_18 = arith.constant 0 : index
      %c0_19 = arith.constant 0 : index
      %c0_20 = arith.constant 0 : index
      %61 = vector.load %arg5[%c0_18, %c0_19, %c0_20] : memref<1x8x128xf32, #tpu.memory_space<vmem>>, vector<1x8x128xf32>
      %62 = vector.shape_cast %61 : vector<1x8x128xf32> to vector<8x128xf32>
      %63 = vector.shape_cast %60 : vector<8x128xf32> to vector<1x8x128xf32>
      tpu.vector_store %arg5[%c0_18, %c0_19, %c0_20], %63 {strides = array<i32>} : memref<1x8x128xf32, #tpu.memory_space<vmem>>, vector<1x8x128xf32>,
      %c0_21 = arith.constant 0 : index
      %c0_22 = arith.constant 0 : index
      %c0_23 = arith.constant 0 : index
      %64 = vector.load %arg6[%c0_21, %c0_22, %c0_23] : memref<1x8x128xf32, #tpu.memory_space<vmem>>, vector<1x8x128xf32>
      %65 = vector.shape_cast %64 : vector<1x8x128xf32> to vector<8x128xf32>
      %66 = arith.addf %65, %47 : vector<8x128xf32>
      %c0_24 = arith.constant 0 : index
      %c0_25 = arith.constant 0 : index
      %c0_26 = arith.constant 0 : index
      %67 = vector.load %arg6[%c0_24, %c0_25, %c0_26] : memref<1x8x128xf32, #tpu.memory_space<vmem>>, vector<1x8x128xf32>
      %68 = vector.shape_cast %67 : vector<1x8x128xf32> to vector<8x128xf32>
      %69 = vector.shape_cast %66 : vector<8x128xf32> to vector<1x8x128xf32>
      tpu.vector_store %arg6[%c0_24, %c0_25, %c0_26], %69 {strides = array<i32>} : memref<1x8x128xf32, #tpu.memory_space<vmem>>, vector<1x8x128xf32>,
      %c0_27 = arith.constant 0 : index
      %c0_28 = arith.constant 0 : index
      %c0_29 = arith.constant 0 : index
      %70 = vector.load %arg7[%c0_27, %c0_28, %c0_29] : memref<1x8x128xf32, #tpu.memory_space<vmem>>, vector<1x8x128xf32>
      %71 = vector.shape_cast %70 : vector<1x8x128xf32> to vector<8x128xf32>
      %72 = arith.addf %71, %51 : vector<8x128xf32>
      %c0_30 = arith.constant 0 : index
      %c0_31 = arith.constant 0 : index
      %c0_32 = arith.constant 0 : index
      %73 = vector.load %arg7[%c0_30, %c0_31, %c0_32] : memref<1x8x128xf32, #tpu.memory_space<vmem>>, vector<1x8x128xf32>
      %74 = vector.shape_cast %73 : vector<1x8x128xf32> to vector<8x128xf32>
      %75 = vector.shape_cast %72 : vector<8x128xf32> to vector<1x8x128xf32>
      tpu.vector_store %arg7[%c0_30, %c0_31, %c0_32], %75 {strides = array<i32>} : memref<1x8x128xf32, #tpu.memory_space<vmem>>, vector<1x8x128xf32>,
    } else {
    }
    return
  }
  func.func @transform_0(%arg0: i32, %arg1: i32, %arg2: i32) -> (i32, i32) {
    %c1_i32 = arith.constant 1 : i32
    %0 = arith.muli %arg0, %c1_i32 : i32
    %1 = arith.addi %0, %arg2 : i32
    %c0_i32 = arith.constant 0 : i32
    return %arg1, %1 : i32, i32
  }
  func.func @transform_1(%arg0: i32, %arg1: i32, %arg2: i32) -> (i32, i32) {
    %c1_i32 = arith.constant 1 : i32
    %0 = arith.muli %arg0, %c1_i32 : i32
    %1 = arith.addi %0, %arg2 : i32
    %c0_i32 = arith.constant 0 : i32
    return %arg1, %1 : i32, i32
  }
  func.func @transform_2(%arg0: i32, %arg1: i32, %arg2: i32) -> (i32, i32, i32) {
    %c0_i32 = arith.constant 0 : i32
    %c0_i32_0 = arith.constant 0 : i32
    return %arg0, %arg1, %c0_i32 : i32, i32, i32
  }
  func.func @transform_3(%arg0: i32, %arg1: i32, %arg2: i32) -> (i32, i32, i32) {
    %c0_i32 = arith.constant 0 : i32
    %c0_i32_0 = arith.constant 0 : i32
    return %arg0, %arg1, %c0_i32 : i32, i32, i32
  }
  func.func @transform_4(%arg0: i32, %arg1: i32, %arg2: i32) -> (i32, i32, i32) {
    %c0_i32 = arith.constant 0 : i32
    %c0_i32_0 = arith.constant 0 : i32
    return %arg0, %arg1, %c0_i32 : i32, i32, i32
  }
}

</mosaic_0001>

<llo_original>
// kernel: tpu_custom_call.1
$region0: #{tpu_custom_call.1}
  #allocation0 [shape = 'u32[]', space=smem, size = 0x4, offset = 0x4, fixed_abs, tag = 'smem constant byte address 0x4 - core index']
  #allocation1 [shape = 'u32[72,128]{1,0:T(1,128)}', space=vmem, size = 0x9000, scoped, tag = 'internal scratch']
  %s0 = inlined_call_operand.hbm [shape: f32[8,256], index: 0, kind: input, shape index: {}]
  %s1 = inlined_call_operand.hbm [shape: f32[8,256], index: 1, kind: input, shape index: {}]
  %s2 = inlined_call_operand.hbm [shape: f32[1,8,128], index: 2, kind: output, shape index: {0}]
  %s3 = inlined_call_operand.hbm [shape: f32[1,8,128], index: 3, kind: output, shape index: {1}]
  %s4 = inlined_call_operand.hbm [shape: f32[1,8,128], index: 4, kind: output, shape index: {2}]
  %5 = xla_tuple %s2, %s3, %s4
  %s6 = sld [smem:[#allocation0]]
  $region50: #{tpu_custom_call.1} parent=0
    _
  %s8 = ssub.s32 1, %s6
  %s9 = scalar_select 0, %s8, %s6
  $region1: #{tpu_custom_call.1} parent=0
    #allocation2 [shape = 'u8[8192]{0}', space=vmem, size = 0x2000, scoped, tag = 'input window, operand 0, single buffered']
    #allocation3 [shape = 's32[1]{0}', space=sflag, size = 0x4, scoped, tag = 'scoped memory for tpu_custom_call.1']
    #allocation4 [shape = 's32[1]{0}', space=sflag, size = 0x4, scoped, tag = 'scoped memory for tpu_custom_call.1']
    #allocation5 [shape = 'u8[8192]{0}', space=vmem, size = 0x2000, scoped, tag = 'input window, operand 1, single buffered']
    #allocation6 [shape = 's32[1]{0}', space=sflag, size = 0x4, scoped, tag = 'scoped memory for tpu_custom_call.1']
    #allocation7 [shape = 'u8[4096]{0}', space=vmem, size = 0x1000, scoped, tag = 'output window, operand 0, single buffered']
    #allocation8 [shape = 'u8[4096]{0}', space=vmem, size = 0x1000, scoped, tag = 'output window, operand 1, single buffered']
    #allocation9 [shape = 's32[1]{0}', space=sflag, size = 0x4, scoped, tag = 'scoped memory for tpu_custom_call.1']
    #allocation10 [shape = 'u8[4096]{0}', space=vmem, size = 0x1000, scoped, tag = 'output window, operand 2, single buffered']
    %10 = vsyncpa [#allocation3], 0
    %11 = vsyncpa [#allocation6], 0
    %12 = vsyncpa [#allocation4], 0
    %13 = vsyncpa [#allocation9], 0
    // Predicated region
    $region2: #{tpu_custom_call.1} parent=1 // pred_check
      _
    $region3: #{tpu_custom_call.1} parent=1 // pred_check_branch
      %15 = sbr.rel (0) target = $region5
    $region4: #{tpu_custom_call.1} parent=1 // pred_region
      %s16 = sadd.s32 0, 0
      %s17 = smul.u32 2, %s16
      %19 = vsyncadd [#allocation3], 0
      %s20 = smul.addr %s17, 8
      %s21 = scalar_lea.hbm %s0, %s20
      %s23 = sshll.u32 %s21, 4
      %s24 = int_to_ptr.hbm [resolvable:$true] %s23
      %s25 = sshll.u32 [#allocation2], 4
      %s26 = int_to_ptr.vmem [resolvable:$true] %s25
      %28 = dma.hbm_to_vmem [thread:$0]  %s24, 256, %s26, [#allocation3]
    $region5: #{tpu_custom_call.1} parent=1 // pred_fallthru
      _
    // Predicated region
    $region6: #{tpu_custom_call.1} parent=1 // pred_check
      _
    $region7: #{tpu_custom_call.1} parent=1 // pred_check_branch
      %30 = sbr.rel (0) target = $region9
    $region8: #{tpu_custom_call.1} parent=1 // pred_region
      %s31 = sadd.s32 0, 0
      %s32 = smul.u32 2, %s31
      %34 = vsyncadd [#allocation6], 0
      %s35 = smul.addr %s32, 8
      %s36 = scalar_lea.hbm %s1, %s35
      %s38 = sshll.u32 %s36, 4
      %s39 = int_to_ptr.hbm [resolvable:$true] %s38
      %s40 = sshll.u32 [#allocation5], 4
      %s41 = int_to_ptr.vmem [resolvable:$true] %s40
      %43 = dma.hbm_to_vmem [thread:$0]  %s39, 256, %s41, [#allocation6]
    $region9: #{tpu_custom_call.1} parent=1 // pred_fallthru
      _
    // Predicated region
    $region10: #{tpu_custom_call.1} parent=1 // pred_check
      _
    $region11: #{tpu_custom_call.1} parent=1 // pred_check_branch
      %45 = sbr.rel (0) target = $region13
    $region12: #{tpu_custom_call.1} parent=1 // pred_region
      %47 = dma.done [#allocation3], 256
    $region13: #{tpu_custom_call.1} parent=1 // pred_fallthru
      _
    // Predicated region
    $region14: #{tpu_custom_call.1} parent=1 // pred_check
      _
    $region15: #{tpu_custom_call.1} parent=1 // pred_check_branch
      %49 = sbr.rel (0) target = $region17
    $region16: #{tpu_custom_call.1} parent=1 // pred_region
      %51 = dma.done [#allocation6], 256
    $region17: #{tpu_custom_call.1} parent=1 // pred_fallthru
      _
    %s52 = sadd.s32 0, 0
    %s53 = smul.u32 2, %s52
    %s54 = sadd.s32 0, 0
    %s55 = smul.u32 2, %s54
    %v56 = vld [vmem:[#allocation2] sm:$0xff]
    %v57 = vld [vmem:[#allocation2 + $0x8] sm:$0xff]
    %v58 = vld [vmem:[#allocation5] sm:$0xff]
    %v59 = vld [vmem:[#allocation5 + $0x8] sm:$0xff]
    %v60 = vand.u32 2147483647, %v56
    %v61 = vand.u32 2147483647, %v57
    %v62 = vsub.f32 0.0, %v60
    %v63 = vsub.f32 0.0, %v61
    %v64 = vmul.f32 %v62, 1.442695
    %v65 = vpow.pop %v64
    %v66 = vmul.f32 %v63, 1.442695
    %v67 = vpow.pop %v66
    %v68 = vadd.f32 %v65, 1.0
    %v69 = vadd.f32 %v67, 1.0
    %v70 = vrcp.pop %v68
    %v71 = vrcp.pop %v69
    %v72 = vmul.f32 %v68, %v70
    %v73 = vmul.f32 %v69, %v71
    %v74 = vsub.f32 2.0, %v72
    %v75 = vsub.f32 2.0, %v73
    %v76 = vmul.f32 %v70, %v74
    %v77 = vmul.f32 %v71, %v75
    %vm78 = vcmp.ge.f32.partialorder %v56, 0.0
    %vm79 = vcmp.ge.f32.partialorder %v57, 0.0
    %v80 = vsel %vm78, 1.0, %v65
    %v81 = vsel %vm79, 1.0, %v67
    %v82 = vmul.f32 %v80, %v76
    %v83 = vmul.f32 %v81, %v77
    %v84 = vmax.f32 %v56, 0.0
    %v85 = vmax.f32 %v57, 0.0
    %v86 = vmul.f32 %v56, %v58
    %v87 = vmul.f32 %v57, %v59
    %v88 = vsub.f32 %v84, %v86
    %v89 = vsub.f32 %v85, %v87
    %v90 = vadd.f32 %v65, 1.0
    %v91 = vlog2.pop %v90
    %v92 = vmul.f32 %v91, 0.6931472
    %v93 = vmul.f32 -0.5, %v65
    %v94 = vadd.f32 %v93, 1.0
    %v95 = vmul.f32 %v94, %v65
    %v96 = vand.u32 2147483647, %v65
    %vm97 = vcmp.lt.f32.partialorder %v96, 0.0004427343
    %v98 = vsel %vm97, %v95, %v92
    %v99 = vadd.f32 %v67, 1.0
    %v100 = vlog2.pop %v99
    %v101 = vmul.f32 %v100, 0.6931472
    %v102 = vmul.f32 -0.5, %v67
    %v103 = vadd.f32 %v102, 1.0
    %v104 = vmul.f32 %v103, %v67
    %v105 = vand.u32 2147483647, %v67
    %vm106 = vcmp.lt.f32.partialorder %v105, 0.0004427343
    %v107 = vsel %vm106, %v104, %v101
    %v108 = vadd.f32 %v88, %v98
    %v109 = vadd.f32 %v89, %v107
    %v110 = vmul.f32 %v82, %v58
    %v111 = vmul.f32 %v83, %v59
    %v112 = vadd.f32 %v82, %v58
    %v113 = vadd.f32 %v83, %v59
    %v114 = vmul.f32 %v110, 2.0
    %v115 = vmul.f32 %v111, 2.0
    %v116 = vsub.f32 %v112, %v114
    %v117 = vsub.f32 %v113, %v115
    %v118 = vmul.f32 %v116, %v116
    %v119 = vmul.f32 %v117, %v117
    %v120 = vmul.f32 %v108, %v118
    %v121 = vmul.f32 %v109, %v119
    %v122 = vmul.f32 %v58, -0.5
    %v123 = vmul.f32 %v59, -0.5
    %v124 = vadd.f32 %v122, 0.75
    %v125 = vadd.f32 %v123, 0.75
    %v126 = vmul.f32 %v124, %v120
    %v127 = vmul.f32 %v125, %v121
    %v128 = vmul.f32 %v82, %v82
    %v129 = vmul.f32 %v83, %v83
    %v130 = vmul.f32 %v58, %v58
    %v131 = vmul.f32 %v59, %v59
    %v132 = vadd.f32 %v128, %v130
    %v133 = vadd.f32 %v129, %v131
    %v134 = vadd.f32 %v126, %v127
    %v135 = vadd.f32 %v134, 0.0
    %v136 = vadd.f32 %v110, %v111
    %v137 = vadd.f32 %v136, 0.0
    %v138 = vadd.f32 %v132, %v133
    %v139 = vadd.f32 %v138, 0.0
    %p140 = scmp.eq.s32.totalorder 0, 0
    // Predicated region
    $region18: #{tpu_custom_call.1} parent=1 // pred_check
      %p141 = pneg %p140
    $region19: #{tpu_custom_call.1} parent=1 // pred_check_branch
      %143 = sbr.rel (%p141) target = $region21
    $region20: #{tpu_custom_call.1} parent=1 // pred_region
      %144 = vst [vmem:[#allocation7] sm:$0xff] %v135
      %145 = vst [vmem:[#allocation8] sm:$0xff] %v137
      %146 = vst [vmem:[#allocation10] sm:$0xff] %v139
    $region21: #{tpu_custom_call.1} parent=1 // pred_fallthru
      _
    %p147 = scmp.gt.s32.totalorder 0, 0
    // Predicated region
    $region22: #{tpu_custom_call.1} parent=1 // pred_check
      %p148 = pneg %p147
    $region23: #{tpu_custom_call.1} parent=1 // pred_check_branch
      %150 = sbr.rel (%p148) target = $region25
    $region24: #{tpu_custom_call.1} parent=1 // pred_region
      %v151 = vld [vmem:[#allocation7] sm:$0xff]
      %v152 = vadd.f32 %v151, %v135
      %153 = vst [vmem:[#allocation7] sm:$0xff] %v152
      %v154 = vld [vmem:[#allocation8] sm:$0xff]
      %v155 = vadd.f32 %v154, %v137
      %156 = vst [vmem:[#allocation8] sm:$0xff] %v155
      %v157 = vld [vmem:[#allocation10] sm:$0xff]
      %v158 = vadd.f32 %v157, %v139
      %159 = vst [vmem:[#allocation10] sm:$0xff] %v158
    $region25: #{tpu_custom_call.1} parent=1 // pred_fallthru
      _
    // Predicated region
    $region26: #{tpu_custom_call.1} parent=1 // pred_check
      _
    $region27: #{tpu_custom_call.1} parent=1 // pred_check_branch
      %161 = sbr.rel (0) target = $region29
    $region28: #{tpu_custom_call.1} parent=1 // pred_region
      %163 = vsyncadd [#allocation4], 0
      %s165 = sshll.u32 [#allocation7], 4
      %s166 = int_to_ptr.vmem [resolvable:$true] %s165
      %s167 = sshll.u32 %s2, 4
      %s168 = int_to_ptr.hbm [resolvable:$true] %s167
      %170 = dma.vmem_to_hbm [thread:$0]  %s166, 128, %s168, [#allocation4]
    $region29: #{tpu_custom_call.1} parent=1 // pred_fallthru
      _
    // Predicated region
    $region30: #{tpu_custom_call.1} parent=1 // pred_check
      _
    $region31: #{tpu_custom_call.1} parent=1 // pred_check_branch
      %172 = sbr.rel (0) target = $region33
    $region32: #{tpu_custom_call.1} parent=1 // pred_region
      %174 = vsyncadd [#allocation9], 0
      %s176 = sshll.u32 [#allocation8], 4
      %s177 = int_to_ptr.vmem [resolvable:$true] %s176
      %s178 = sshll.u32 %s3, 4
      %s179 = int_to_ptr.hbm [resolvable:$true] %s178
      %181 = dma.vmem_to_hbm [thread:$0]  %s177, 128, %s179, [#allocation9]
    $region33: #{tpu_custom_call.1} parent=1 // pred_fallthru
      _
    // Predicated region
    $region34: #{tpu_custom_call.1} parent=1 // pred_check
      _
    $region35: #{tpu_custom_call.1} parent=1 // pred_check_branch
      %183 = sbr.rel (0) target = $region37
    $region36: #{tpu_custom_call.1} parent=1 // pred_region
      %185 = vsyncadd [#allocation9], 0
      %s187 = sshll.u32 [#allocation10], 4
      %s188 = int_to_ptr.vmem [resolvable:$true] %s187
      %s189 = sshll.u32 %s4, 4
      %s190 = int_to_ptr.hbm [resolvable:$true] %s189
      %192 = dma.vmem_to_hbm [thread:$0]  %s188, 128, %s190, [#allocation9]
    $region37: #{tpu_custom_call.1} parent=1 // pred_fallthru
      _
    // Predicated region
    $region38: #{tpu_custom_call.1} parent=1 // pred_check
      _
    $region39: #{tpu_custom_call.1} parent=1 // pred_check_branch
      %194 = sbr.rel (0) target = $region41
    $region40: #{tpu_custom_call.1} parent=1 // pred_region
      %196 = dma.done [#allocation4], 128
    $region41: #{tpu_custom_call.1} parent=1 // pred_fallthru
      _
    // Predicated region
    $region42: #{tpu_custom_call.1} parent=1 // pred_check
      _
    $region43: #{tpu_custom_call.1} parent=1 // pred_check_branch
      %198 = sbr.rel (0) target = $region45
    $region44: #{tpu_custom_call.1} parent=1 // pred_region
      %200 = dma.done [#allocation9], 128
    $region45: #{tpu_custom_call.1} parent=1 // pred_fallthru
      _
    // Predicated region
    $region46: #{tpu_custom_call.1} parent=1 // pred_check
      _
    $region47: #{tpu_custom_call.1} parent=1 // pred_check_branch
      %202 = sbr.rel (0) target = $region49
    $region48: #{tpu_custom_call.1} parent=1 // pred_region
      %204 = dma.done [#allocation9], 128
    $region49: #{tpu_custom_call.1} parent=1 // pred_fallthru
      _
    %205 = vsyncpa [#allocation3], 1
    %206 = vsyncpa [#allocation6], 1
    %207 = vsyncpa [#allocation4], 1
    %208 = vsyncpa [#allocation9], 1

</llo_original>
